<compile_context>
chip_gen: v7x
topology: tpu7x:2x2x1
jax: 0.10.0
libtpu: 0.0.40
codegen_flags: <defaults>
</compile_context>

<pallas_src>
import functools

import jax
import jax.numpy as jnp
from jax.experimental import pallas as pl
from jax.experimental.pallas import tpu as pltpu


# --------------------------------------------------------------------------- #
# Pass 1: L2-normalize, emit bf16 features + exact f32 positive logit
# --------------------------------------------------------------------------- #
def _normalize_kernel(f1_ref, f2_ref, fn_ref, pos_ref, *, inv_t):
    x1 = f1_ref[...].astype(jnp.float32)
    x2 = f2_ref[...].astype(jnp.float32)
    # torch F.normalize(eps=1e-12): x / max(||x||, 1e-12)
    n1 = x1 * jax.lax.rsqrt(jnp.maximum(jnp.sum(x1 * x1, axis=1, keepdims=True),
                                        jnp.float32(1e-24)))
    n2 = x2 * jax.lax.rsqrt(jnp.maximum(jnp.sum(x2 * x2, axis=1, keepdims=True),
                                        jnp.float32(1e-24)))
    fn_ref[0, :, :] = n1.astype(fn_ref.dtype)
    fn_ref[1, :, :] = n2.astype(fn_ref.dtype)
    # Positive logit sim[i, i+B]/t == <n1_i, n2_i>/t, computed in f32 before the
    # bf16 cast (tighter than the MXU path, esp. for small temperatures).
    pos_ref[...] = jnp.sum(n1 * n2, axis=1, keepdims=True) * jnp.float32(inv_t)


# --------------------------------------------------------------------------- #
# Pass 2: flash-style tiled similarity + online logsumexp
# --------------------------------------------------------------------------- #
def _infonce_flash_kernel(fr_ref, fc_ref, lse_ref, m_ref, l_ref, *,
                          tr, tc, bsz, bp, inv_t, resident, has_pad):
    i = pl.program_id(0)            # row block   ("parallel")
    j = pl.program_id(1)            # col block   ("arbitrary" / reduction)
    ncol = pl.num_programs(1)

    @pl.when(j == 0)
    def _():
        # Finite floor (masked columns use -inf) => no inf-inf NaNs possible.
        m_ref[...] = jnp.full_like(m_ref, -1e30)
        l_ref[...] = jnp.zeros_like(l_ref)

    if resident:
        # Whole (N, D) bf16 matrix lives in VMEM; slice this step's Tc columns.
        col_off = pl.multiple_of(j * tc, tc)
        fc = fc_ref[pl.ds(col_off, tc), :]
    else:
        fc = fc_ref[...]

    # (Tr, Tc) block of sim; bf16 operands, f32 accumulation, contraction over
    # dim 1 of BOTH operands (no transpose materialized).  1/t applied in f32
    # on the MXU output (VPU mul, hidden under the MXU).
    s = jax.lax.dot_general(
        fr_ref[...], fc,
        dimension_numbers=(((1,), (1,)), ((), ())),
        preferred_element_type=jnp.float32) * jnp.float32(inv_t)

    def update(s_blk):
        m_prev = m_ref[...]
        m_new = jnp.maximum(m_prev, jnp.max(s_blk, axis=1, keepdims=True))
        alpha = jnp.exp(m_prev - m_new)
        l_ref[...] = alpha * l_ref[...] + jnp.sum(jnp.exp(s_blk - m_new),
                                                  axis=1, keepdims=True)
        m_ref[...] = m_new

    if has_pad:
        # Padded-batch path: mask padded columns and the self-diagonal.
        gr = i * tr + jax.lax.broadcasted_iota(jnp.int32, (tr, tc), 0)
        gc = j * tc + jax.lax.broadcasted_iota(jnp.int32, (tr, tc), 1)
        col_in_view = jnp.where(gc < bp, gc, gc - bp)
        invalid = jnp.logical_or(gr == gc, col_in_view >= bsz)
        update(jnp.where(invalid, -jnp.inf, s))
    else:
        # Fast path: only the blocks that actually contain the self-diagonal
        # pay for the iota/compare/select; all others are plain max/exp/sum.
        row_start = i * tr
        col_start = j * tc
        diag_hit = jnp.logical_and(col_start < row_start + tr,
                                   row_start < col_start + tc)

        @pl.when(diag_hit)
        def _():
            gr = row_start + jax.lax.broadcasted_iota(jnp.int32, (tr, tc), 0)
            gc = col_start + jax.lax.broadcasted_iota(jnp.int32, (tr, tc), 1)
            update(jnp.where(gr == gc, -jnp.inf, s))

        @pl.when(jnp.logical_not(diag_hit))
        def _():
            update(s)

    @pl.when(j == ncol - 1)
    def _():
        lse_ref[...] = m_ref[...] + jnp.log(l_ref[...])


# --------------------------------------------------------------------------- #
# Tile / VMEM policy
# --------------------------------------------------------------------------- #
def _round_up(x, m):
    return ((x + m - 1) // m) * m


def _vmem_budget_bytes():
    try:
        cap = int(pltpu.get_tpu_info().vmem_capacity_bytes)
    except Exception:
        cap = 64 * 1024 * 1024
    # Leave headroom for compiler-internal scratch: ~48 MiB on v7x (64 MiB
    # physical), ~96 MiB on v5e/v6e (128 MiB physical).
    return (cap * 3) // 4


def _pick_pass1_tile(bp, dim, in_itemsize, budget):
    for t1 in (512, 256, 128):
        if bp % t1:
            continue
        need = (2 * 2 * t1 * dim * in_itemsize       # 2 inputs, double-buffered
                + 2 * (2 * t1 * dim * 2)             # (2,T1,D) bf16 out, 2 bufs
                + 4 * t1 * 4 + (1 << 20))
        if need <= budget:
            return t1
    # TODO(synk): tile the feature dim in pass 1 for extremely large D.
    return 128


def _pick_pass2_tiles(n, dim, budget):
    tc = 256
    col_full = n * dim * 2                           # whole bf16 feature matrix

    def need(tr, resident):
        row = 2 * tr * dim * 2                       # row tile, double-buffered
        col = 2 * col_full if resident else 3 * tc * dim * 2   # Buffered(3)
        sblk = 6 * tr * tc * 4                       # sim block + exp/mask temps
        return row + col + sblk + 3 * tr * 4 * 2 + (1 << 20)

    resident = need(128, True) <= budget
    tr = 128
    for cand in (1024, 512, 256, 128):
        if n % cand == 0 and n // cand >= 2 and need(cand, resident) <= budget:
            tr = cand
            break
    # Prefer an even number of row blocks so both v7x TensorCores get work.
    if (n // tr) % 2 == 1 and tr >= 256 and n % (tr // 2) == 0:
        tr //= 2
    return tr, tc, resident


# --------------------------------------------------------------------------- #
# Public wrapper
# --------------------------------------------------------------------------- #
def infonce_loss(feature_view_1, feature_view_2, *, temperature=0.1, reduction=None):
    """InfoNCE loss via two Pallas TPU kernels (normalize pass + flash pass)."""
    assert feature_view_1.shape == feature_view_2.shape
    assert feature_view_1.ndim == 2
    bsz, dim = feature_view_1.shape
    inv_t = 1.0 / float(temperature)

    # Pad the per-view batch to a multiple of 128 (full MXU / vreg tiles);
    # padded rows are masked out of the logsumexp and dropped from the loss.
    bp = max(128, _round_up(bsz, 128))
    has_pad = bp != bsz
    if has_pad:
        pad = ((0, bp - bsz), (0, 0))
        feature_view_1 = jnp.pad(feature_view_1, pad)
        feature_view_2 = jnp.pad(feature_view_2, pad)
    n = 2 * bp

    vmem_budget = _vmem_budget_bytes()

    # ---- Pass 1: normalized bf16 features + exact f32 positive logits -------
    t1 = _pick_pass1_tile(bp, dim, feature_view_1.dtype.itemsize, vmem_budget)
    fns, pos = pl.pallas_call(
        functools.partial(_normalize_kernel, inv_t=inv_t),
        out_shape=(jax.ShapeDtypeStruct((2, bp, dim), jnp.bfloat16),
                   jax.ShapeDtypeStruct((bp, 1), jnp.float32)),
        grid_spec=pltpu.PrefetchScalarGridSpec(
            num_scalar_prefetch=0,
            grid=(bp // t1,),
            in_specs=[
                pl.BlockSpec((t1, dim), lambda i: (i, 0)),
                pl.BlockSpec((t1, dim), lambda i: (i, 0)),
            ],
            out_specs=[
                pl.BlockSpec((2, t1, dim), lambda i: (0, i, 0)),
                pl.BlockSpec((t1, 1), lambda i: (i, 0)),
            ],
        ),
        compiler_params=pltpu.CompilerParams(
            dimension_semantics=("parallel",),
            vmem_limit_bytes=vmem_budget,
        ),
    )(feature_view_1, feature_view_2)

    # (2, Bp, D) -> (N, D): contiguous reshape, no data movement.
    fns = fns.reshape(n, dim)

    # ---- Pass 2: flash-style tiled logsumexp over the similarity matrix -----
    tr, tc, resident = _pick_pass2_tiles(n, dim, vmem_budget)
    if resident:
        # Whole column matrix resident in VMEM: constant index map, no re-stream.
        col_spec = pl.BlockSpec((n, dim), lambda i, j: (0, 0))
    else:
        # Streamed column tiles, triple-buffered to hide DMA jitter.
        col_spec = pl.BlockSpec((tc, dim), lambda i, j: (j, 0),
                                pipeline_mode=pl.Buffered(3))

    flash = functools.partial(
        _infonce_flash_kernel,
        tr=tr, tc=tc, bsz=bsz, bp=bp, inv_t=inv_t,
        resident=resident, has_pad=has_pad)

    lse = pl.pallas_call(
        flash,
        out_shape=jax.ShapeDtypeStruct((n, 1), jnp.float32),
        grid_spec=pltpu.PrefetchScalarGridSpec(
            num_scalar_prefetch=0,
            grid=(n // tr, n // tc),
            in_specs=[
                pl.BlockSpec((tr, dim), lambda i, j: (i, 0)),   # resident row tile
                col_spec,
            ],
            out_specs=pl.BlockSpec((tr, 1), lambda i, j: (i, 0)),
            scratch_shapes=[
                pltpu.VMEM((tr, 1), jnp.float32),   # running max m
                pltpu.VMEM((tr, 1), jnp.float32),   # running sum l
            ],
        ),
        compiler_params=pltpu.CompilerParams(
            dimension_semantics=("parallel", "arbitrary"),
            vmem_limit_bytes=vmem_budget,
        ),
    )(fns, fns)

    # loss_i = lse_i - pos_i ; positive of row i and of row Bp+i is identical.
    pos = pos[:, 0]
    per_sample = lse[:, 0] - jnp.concatenate([pos, pos], axis=0)
    # Drop the padded rows: valid rows are [0, B) and [Bp, Bp+B).
    per_sample = per_sample.reshape(2, bp)[:, :bsz].reshape(-1)

    if reduction in (None, "mean"):
        return jnp.mean(per_sample)
    if reduction == "sum":
        return jnp.sum(per_sample)
    return per_sample  # reduction == 'none'


# --------------------------------------------------------------------------- #
# Pure-JAX reference + self-test
# --------------------------------------------------------------------------- #
def _infonce_reference(f1, f2, temperature=0.1):
    """Pure-JAX f32 reference (mean reduction)."""
    f = jnp.concatenate([f1, f2], axis=0).astype(jnp.float32)
    n = f.shape[0]
    b = n // 2
    fn = f / jnp.maximum(jnp.linalg.norm(f, axis=1, keepdims=True), 1e-12)
    sim = jnp.matmul(fn, fn.T, precision=jax.lax.Precision.HIGHEST) / temperature
    diag = jnp.eye(n, dtype=bool)
    masked = jnp.where(diag, -jnp.inf, sim)
    lse = jax.nn.logsumexp(masked, axis=1)
    pos = sim[jnp.arange(n), (jnp.arange(n) + b) % n]
    return jnp.mean(lse - pos)


if __name__ == "__main__":
    key = jax.random.PRNGKey(0)
    k1, k2 = jax.random.split(key)
    batch, hidden = 16, 32
    feature_view_1 = jax.random.normal(k1, (batch, hidden), dtype=jnp.float32)
    feature_view_2 = jax.random.normal(k2, (batch, hidden), dtype=jnp.float32)

    loss = infonce_loss(feature_view_1, feature_view_2, temperature=0.1, reduction=None)
    loss = jax.block_until_ready(loss)

    ref = _infonce_reference(feature_view_1, feature_view_2, temperature=0.1)
    # bf16 MXU negatives => small absolute slack on the logsumexp.
    assert bool(jnp.isfinite(loss)), loss
    assert jnp.allclose(loss, ref, rtol=3e-2, atol=3e-2), (loss, ref)

    print("KERNEL_OK")
</pallas_src>

<mosaic_0001>
module attributes {stable_mosaic.version = 11 : i64} {
  func.func @_normalize_kernel(%arg0: i32, %arg1: memref<128x32xf32, #tpu.memory_space<vmem>>, %arg2: memref<128x32xf32, #tpu.memory_space<vmem>>, %arg3: memref<2x128x32xbf16, #tpu.memory_space<vmem>>, %arg4: memref<128x1xf32, #tpu.memory_space<vmem>>) attributes {dimension_semantics = [#tpu.dimension_semantics<parallel>], iteration_bounds = array<i64: 1>, scalar_prefetch = 0 : i64, scratch_operands = 0 : i64, tpu.core_type = #tpu.core_type<tc>, window_params = [{transform_indices = @transform_0, window_bounds = array<i64: 128, 32>}, {transform_indices = @transform_1, window_bounds = array<i64: 128, 32>}, {transform_indices = @transform_2, window_bounds = array<i64: 2, 128, 32>}, {transform_indices = @transform_3, window_bounds = array<i64: 128, 1>}]} {
    %c0 = arith.constant 0 : index
    %c0_0 = arith.constant 0 : index
    %0 = vector.load %arg1[%c0, %c0_0] : memref<128x32xf32, #tpu.memory_space<vmem>>, vector<128x32xf32>
    %c0_1 = arith.constant 0 : index
    %c0_2 = arith.constant 0 : index
    %1 = vector.load %arg2[%c0_1, %c0_2] : memref<128x32xf32, #tpu.memory_space<vmem>>, vector<128x32xf32>
    %2 = arith.mulf %0, %0 : vector<128x32xf32>
    %cst = arith.constant dense<0.000000e+00> : vector<128xf32>
    %3 = vector.multi_reduction <add>, %2, %cst [1] : vector<128x32xf32> to vector<128xf32>
    %4 = vector.shape_cast %3 : vector<128xf32> to vector<128x1xf32>
    %cst_3 = arith.constant 1.000000e-24 : f32
    %5 = vector.broadcast %cst_3 : f32 to vector<128x1xf32>
    %6 = arith.maximumf %4, %5 : vector<128x1xf32>
    %7 = math.rsqrt %6 : vector<128x1xf32>
    %8 = vector.broadcast %7 : vector<128x1xf32> to vector<128x32xf32>
    %9 = arith.mulf %0, %8 : vector<128x32xf32>
    %10 = arith.mulf %1, %1 : vector<128x32xf32>
    %cst_4 = arith.constant dense<0.000000e+00> : vector<128xf32>
    %11 = vector.multi_reduction <add>, %10, %cst_4 [1] : vector<128x32xf32> to vector<128xf32>
    %12 = vector.shape_cast %11 : vector<128xf32> to vector<128x1xf32>
    %cst_5 = arith.constant 1.000000e-24 : f32
    %13 = vector.broadcast %cst_5 : f32 to vector<128x1xf32>
    %14 = arith.maximumf %12, %13 : vector<128x1xf32>
    %15 = math.rsqrt %14 : vector<128x1xf32>
    %16 = vector.broadcast %15 : vector<128x1xf32> to vector<128x32xf32>
    %17 = arith.mulf %1, %16 : vector<128x32xf32>
    %18 = arith.truncf %9 : vector<128x32xf32> to vector<128x32xbf16>
    %c0_6 = arith.constant 0 : index
    %c0_7 = arith.constant 0 : index
    %c0_8 = arith.constant 0 : index
    %19 = vector.load %arg3[%c0_6, %c0_7, %c0_8] : memref<2x128x32xbf16, #tpu.memory_space<vmem>>, vector<1x128x32xbf16>
    %20 = vector.shape_cast %19 : vector<1x128x32xbf16> to vector<128x32xbf16>
    %21 = vector.shape_cast %18 : vector<128x32xbf16> to vector<1x128x32xbf16>
    tpu.vector_store %arg3[%c0_6, %c0_7, %c0_8], %21 {strides = array<i32>} : memref<2x128x32xbf16, #tpu.memory_space<vmem>>, vector<1x128x32xbf16>,
    %22 = arith.truncf %17 : vector<128x32xf32> to vector<128x32xbf16>
    %c1 = arith.constant 1 : index
    %c0_9 = arith.constant 0 : index
    %c0_10 = arith.constant 0 : index
    %23 = vector.load %arg3[%c1, %c0_9, %c0_10] : memref<2x128x32xbf16, #tpu.memory_space<vmem>>, vector<1x128x32xbf16>
    %24 = vector.shape_cast %23 : vector<1x128x32xbf16> to vector<128x32xbf16>
    %25 = vector.shape_cast %22 : vector<128x32xbf16> to vector<1x128x32xbf16>
    tpu.vector_store %arg3[%c1, %c0_9, %c0_10], %25 {strides = array<i32>} : memref<2x128x32xbf16, #tpu.memory_space<vmem>>, vector<1x128x32xbf16>,
    %26 = arith.mulf %9, %17 : vector<128x32xf32>
    %cst_11 = arith.constant dense<0.000000e+00> : vector<128xf32>
    %27 = vector.multi_reduction <add>, %26, %cst_11 [1] : vector<128x32xf32> to vector<128xf32>
    %28 = vector.shape_cast %27 : vector<128xf32> to vector<128x1xf32>
    %cst_12 = arith.constant 1.000000e+01 : f32
    %29 = vector.broadcast %cst_12 : f32 to vector<128x1xf32>
    %30 = arith.mulf %28, %29 : vector<128x1xf32>
    %c0_13 = arith.constant 0 : index
    %c0_14 = arith.constant 0 : index
    %31 = vector.load %arg4[%c0_13, %c0_14] : memref<128x1xf32, #tpu.memory_space<vmem>>, vector<128x1xf32>
    tpu.vector_store %arg4[%c0_13, %c0_14], %30 {strides = array<i32>} : memref<128x1xf32, #tpu.memory_space<vmem>>, vector<128x1xf32>,
    return
  }
  func.func @transform_0(%arg0: i32) -> (i32, i32) {
    %c0_i32 = arith.constant 0 : i32
    %c0_i32_0 = arith.constant 0 : i32
    return %arg0, %c0_i32 : i32, i32
  }
  func.func @transform_1(%arg0: i32) -> (i32, i32) {
    %c0_i32 = arith.constant 0 : i32
    %c0_i32_0 = arith.constant 0 : i32
    return %arg0, %c0_i32 : i32, i32
  }
  func.func @transform_2(%arg0: i32) -> (i32, i32, i32) {
    %c0_i32 = arith.constant 0 : i32
    %c0_i32_0 = arith.constant 0 : i32
    %c0_i32_1 = arith.constant 0 : i32
    return %c0_i32, %arg0, %c0_i32_0 : i32, i32, i32
  }
  func.func @transform_3(%arg0: i32) -> (i32, i32) {
    %c0_i32 = arith.constant 0 : i32
    %c0_i32_0 = arith.constant 0 : i32
    return %arg0, %c0_i32 : i32, i32
  }
}

</mosaic_0001>

<llo_original>
// kernel: tpu_custom_call.1
$region0: #{tpu_custom_call.1}
  #allocation0 [shape = 'u32[]', space=smem, size = 0x4, offset = 0x4, fixed_abs, tag = 'smem constant byte address 0x4 - core index']
  #allocation1 [shape = 'u32[144,128]{1,0:T(1,128)}', space=vmem, size = 0x12000, scoped, tag = 'internal scratch']
  %s0 = inlined_call_operand.vmem [shape: f32[128,32], index: 0, kind: input, shape index: {}]
  %s1 = inlined_call_operand.vmem [shape: f32[128,32], index: 1, kind: input, shape index: {}]
  %s2 = inlined_call_operand.vmem [shape: bf16[2,128,32], index: 2, kind: output, shape index: {0}]
  %s3 = inlined_call_operand.vmem [shape: f32[128,1], index: 3, kind: output, shape index: {1}]
  %4 = xla_tuple %s2, %s3
  %s5 = sld [smem:[#allocation0]]
  $region26: #{tpu_custom_call.1} parent=0
    _
  %s7 = ssub.s32 1, %s5
  %s8 = scalar_select 0, %s7, %s5
  // Predicated region
  $region2: #{tpu_custom_call.1} parent=0 // pred_check
    _
  $region3: #{tpu_custom_call.1} parent=0 // pred_check_branch
    %10 = sbr.rel (0) target = $region5
  $region4: #{tpu_custom_call.1} parent=0 // pred_region
    _
  $region5: #{tpu_custom_call.1} parent=0 // pred_fallthru
    _
  // Predicated region
  $region6: #{tpu_custom_call.1} parent=0 // pred_check
    _
  $region7: #{tpu_custom_call.1} parent=0 // pred_check_branch
    %12 = sbr.rel (0) target = $region9
  $region8: #{tpu_custom_call.1} parent=0 // pred_region
    _
  $region9: #{tpu_custom_call.1} parent=0 // pred_fallthru
    _
  %v13 = vld [vmem:[%s0] sm:$0xff]
  %v14 = vld [vmem:[%s0 + $0x8] sm:$0xff]
  %v15 = vld [vmem:[%s0 + $0x10] sm:$0xff]
  %v16 = vld [vmem:[%s0 + $0x18] sm:$0xff]
  %v17 = vld [vmem:[%s0 + $0x20] sm:$0xff]
  %v18 = vld [vmem:[%s0 + $0x28] sm:$0xff]
  %v19 = vld [vmem:[%s0 + $0x30] sm:$0xff]
  %v20 = vld [vmem:[%s0 + $0x38] sm:$0xff]
  %v21 = vld [vmem:[%s0 + $0x40] sm:$0xff]
  %v22 = vld [vmem:[%s0 + $0x48] sm:$0xff]
  %v23 = vld [vmem:[%s0 + $0x50] sm:$0xff]
  %v24 = vld [vmem:[%s0 + $0x58] sm:$0xff]
  %v25 = vld [vmem:[%s0 + $0x60] sm:$0xff]
  %v26 = vld [vmem:[%s0 + $0x68] sm:$0xff]
  %v27 = vld [vmem:[%s0 + $0x70] sm:$0xff]
  %v28 = vld [vmem:[%s0 + $0x78] sm:$0xff]
  %v29 = vld [vmem:[%s1] sm:$0xff]
  %v30 = vld [vmem:[%s1 + $0x8] sm:$0xff]
  %v31 = vld [vmem:[%s1 + $0x10] sm:$0xff]
  %v32 = vld [vmem:[%s1 + $0x18] sm:$0xff]
  %v33 = vld [vmem:[%s1 + $0x20] sm:$0xff]
  %v34 = vld [vmem:[%s1 + $0x28] sm:$0xff]
  %v35 = vld [vmem:[%s1 + $0x30] sm:$0xff]
  %v36 = vld [vmem:[%s1 + $0x38] sm:$0xff]
  %v37 = vld [vmem:[%s1 + $0x40] sm:$0xff]
  %v38 = vld [vmem:[%s1 + $0x48] sm:$0xff]
  %v39 = vld [vmem:[%s1 + $0x50] sm:$0xff]
  %v40 = vld [vmem:[%s1 + $0x58] sm:$0xff]
  %v41 = vld [vmem:[%s1 + $0x60] sm:$0xff]
  %v42 = vld [vmem:[%s1 + $0x68] sm:$0xff]
  %v43 = vld [vmem:[%s1 + $0x70] sm:$0xff]
  %v44 = vld [vmem:[%s1 + $0x78] sm:$0xff]
  %v45 = vmul.f32 %v13, %v13
  %v46 = vmul.f32 %v14, %v14
  %v47 = vmul.f32 %v15, %v15
  %v48 = vmul.f32 %v16, %v16
  %v49 = vmul.f32 %v17, %v17
  %v50 = vmul.f32 %v18, %v18
  %v51 = vmul.f32 %v19, %v19
  %v52 = vmul.f32 %v20, %v20
  %v53 = vmul.f32 %v21, %v21
  %v54 = vmul.f32 %v22, %v22
  %v55 = vmul.f32 %v23, %v23
  %v56 = vmul.f32 %v24, %v24
  %v57 = vmul.f32 %v25, %v25
  %v58 = vmul.f32 %v26, %v26
  %v59 = vmul.f32 %v27, %v27
  %v60 = vmul.f32 %v28, %v28
  %vm61 = vcmask 261120
  %v62 = vsel %vm61, %v45, 0.0
  %63 = vadd.xlane.f32.xlu0 %v62
  %v64 = vpop.xlane.xlu0 %63
  %v65 = vsel %vm61, %v46, 0.0
  %66 = vadd.xlane.f32.xlu0 %v65
  %v67 = vpop.xlane.xlu0 %66
  %v68 = vsel %vm61, %v47, 0.0
  %69 = vadd.xlane.f32.xlu0 %v68
  %v70 = vpop.xlane.xlu0 %69
  %v71 = vsel %vm61, %v48, 0.0
  %72 = vadd.xlane.f32.xlu0 %v71
  %v73 = vpop.xlane.xlu0 %72
  %v74 = vsel %vm61, %v49, 0.0
  %75 = vadd.xlane.f32.xlu0 %v74
  %v76 = vpop.xlane.xlu0 %75
  %v77 = vsel %vm61, %v50, 0.0
  %78 = vadd.xlane.f32.xlu0 %v77
  %v79 = vpop.xlane.xlu0 %78
  %v80 = vsel %vm61, %v51, 0.0
  %81 = vadd.xlane.f32.xlu0 %v80
  %v82 = vpop.xlane.xlu0 %81
  %v83 = vsel %vm61, %v52, 0.0
  %84 = vadd.xlane.f32.xlu0 %v83
  %v85 = vpop.xlane.xlu0 %84
  %v86 = vsel %vm61, %v53, 0.0
  %87 = vadd.xlane.f32.xlu0 %v86
  %v88 = vpop.xlane.xlu0 %87
  %v89 = vsel %vm61, %v54, 0.0
  %90 = vadd.xlane.f32.xlu0 %v89
  %v91 = vpop.xlane.xlu0 %90
  %v92 = vsel %vm61, %v55, 0.0
  %93 = vadd.xlane.f32.xlu0 %v92
  %v94 = vpop.xlane.xlu0 %93
  %v95 = vsel %vm61, %v56, 0.0
  %96 = vadd.xlane.f32.xlu0 %v95
  %v97 = vpop.xlane.xlu0 %96
  %v98 = vsel %vm61, %v57, 0.0
  %99 = vadd.xlane.f32.xlu0 %v98
  %v100 = vpop.xlane.xlu0 %99
  %v101 = vsel %vm61, %v58, 0.0
  %102 = vadd.xlane.f32.xlu0 %v101
  %v103 = vpop.xlane.xlu0 %102
  %v104 = vsel %vm61, %v59, 0.0
  %105 = vadd.xlane.f32.xlu0 %v104
  %v106 = vpop.xlane.xlu0 %105
  %v107 = vsel %vm61, %v60, 0.0
  %108 = vadd.xlane.f32.xlu0 %v107
  %v109 = vpop.xlane.xlu0 %108
  %v110 = vmax.f32 %v64, 1e-24
  %v111 = vmax.f32 %v67, 1e-24
  %v112 = vmax.f32 %v70, 1e-24
  %v113 = vmax.f32 %v73, 1e-24
  %v114 = vmax.f32 %v76, 1e-24
  %v115 = vmax.f32 %v79, 1e-24
  %v116 = vmax.f32 %v82, 1e-24
  %v117 = vmax.f32 %v85, 1e-24
  %v118 = vmax.f32 %v88, 1e-24
  %v119 = vmax.f32 %v91, 1e-24
  %v120 = vmax.f32 %v94, 1e-24
  %v121 = vmax.f32 %v97, 1e-24
  %v122 = vmax.f32 %v100, 1e-24
  %v123 = vmax.f32 %v103, 1e-24
  %v124 = vmax.f32 %v106, 1e-24
  %v125 = vmax.f32 %v109, 1e-24
  %v126 = vrsqrt.pop %v110
  %v127 = vrsqrt.pop %v111
  %v128 = vrsqrt.pop %v112
  %v129 = vrsqrt.pop %v113
  %v130 = vrsqrt.pop %v114
  %v131 = vrsqrt.pop %v115
  %v132 = vrsqrt.pop %v116
  %v133 = vrsqrt.pop %v117
  %v134 = vrsqrt.pop %v118
  %v135 = vrsqrt.pop %v119
  %v136 = vrsqrt.pop %v120
  %v137 = vrsqrt.pop %v121
  %v138 = vrsqrt.pop %v122
  %v139 = vrsqrt.pop %v123
  %v140 = vrsqrt.pop %v124
  %v141 = vrsqrt.pop %v125
  %v142 = vmul.f32 %v13, %v126
  %v143 = vmul.f32 %v14, %v127
  %v144 = vmul.f32 %v15, %v128
  %v145 = vmul.f32 %v16, %v129
  %v146 = vmul.f32 %v17, %v130
  %v147 = vmul.f32 %v18, %v131
  %v148 = vmul.f32 %v19, %v132
  %v149 = vmul.f32 %v20, %v133
  %v150 = vmul.f32 %v21, %v134
  %v151 = vmul.f32 %v22, %v135
  %v152 = vmul.f32 %v23, %v136
  %v153 = vmul.f32 %v24, %v137
  %v154 = vmul.f32 %v25, %v138
  %v155 = vmul.f32 %v26, %v139
  %v156 = vmul.f32 %v27, %v140
  %v157 = vmul.f32 %v28, %v141
  %v158 = vmul.f32 %v29, %v29
  %v159 = vmul.f32 %v30, %v30
  %v160 = vmul.f32 %v31, %v31
  %v161 = vmul.f32 %v32, %v32
  %v162 = vmul.f32 %v33, %v33
  %v163 = vmul.f32 %v34, %v34
  %v164 = vmul.f32 %v35, %v35
  %v165 = vmul.f32 %v36, %v36
  %v166 = vmul.f32 %v37, %v37
  %v167 = vmul.f32 %v38, %v38
  %v168 = vmul.f32 %v39, %v39
  %v169 = vmul.f32 %v40, %v40
  %v170 = vmul.f32 %v41, %v41
  %v171 = vmul.f32 %v42, %v42
  %v172 = vmul.f32 %v43, %v43
  %v173 = vmul.f32 %v44, %v44
  %v174 = vsel %vm61, %v158, 0.0
  %175 = vadd.xlane.f32.xlu0 %v174
  %v176 = vpop.xlane.xlu0 %175
  %v177 = vsel %vm61, %v159, 0.0
  %178 = vadd.xlane.f32.xlu0 %v177
  %v179 = vpop.xlane.xlu0 %178
  %v180 = vsel %vm61, %v160, 0.0
  %181 = vadd.xlane.f32.xlu0 %v180
  %v182 = vpop.xlane.xlu0 %181
  %v183 = vsel %vm61, %v161, 0.0
  %184 = vadd.xlane.f32.xlu0 %v183
  %v185 = vpop.xlane.xlu0 %184
  %v186 = vsel %vm61, %v162, 0.0
  %187 = vadd.xlane.f32.xlu0 %v186
  %v188 = vpop.xlane.xlu0 %187
  %v189 = vsel %vm61, %v163, 0.0
  %190 = vadd.xlane.f32.xlu0 %v189
  %v191 = vpop.xlane.xlu0 %190
  %v192 = vsel %vm61, %v164, 0.0
  %193 = vadd.xlane.f32.xlu0 %v192
  %v194 = vpop.xlane.xlu0 %193
  %v195 = vsel %vm61, %v165, 0.0
  %196 = vadd.xlane.f32.xlu0 %v195
  %v197 = vpop.xlane.xlu0 %196
  %v198 = vsel %vm61, %v166, 0.0
  %199 = vadd.xlane.f32.xlu0 %v198
  %v200 = vpop.xlane.xlu0 %199
  %v201 = vsel %vm61, %v167, 0.0
  %202 = vadd.xlane.f32.xlu0 %v201
  %v203 = vpop.xlane.xlu0 %202
  %v204 = vsel %vm61, %v168, 0.0
  %205 = vadd.xlane.f32.xlu0 %v204
  %v206 = vpop.xlane.xlu0 %205
  %v207 = vsel %vm61, %v169, 0.0
  %208 = vadd.xlane.f32.xlu0 %v207
  %v209 = vpop.xlane.xlu0 %208
  %v210 = vsel %vm61, %v170, 0.0
  %211 = vadd.xlane.f32.xlu0 %v210
  %v212 = vpop.xlane.xlu0 %211
  %v213 = vsel %vm61, %v171, 0.0
  %214 = vadd.xlane.f32.xlu0 %v213
  %v215 = vpop.xlane.xlu0 %214
  %v216 = vsel %vm61, %v172, 0.0
  %217 = vadd.xlane.f32.xlu0 %v216
  %v218 = vpop.xlane.xlu0 %217
  %v219 = vsel %vm61, %v173, 0.0
  %220 = vadd.xlane.f32.xlu0 %v219
  %v221 = vpop.xlane.xlu0 %220
  %v222 = vmax.f32 %v176, 1e-24
  %v223 = vmax.f32 %v179, 1e-24
  %v224 = vmax.f32 %v182, 1e-24
  %v225 = vmax.f32 %v185, 1e-24
  %v226 = vmax.f32 %v188, 1e-24
  %v227 = vmax.f32 %v191, 1e-24
  %v228 = vmax.f32 %v194, 1e-24
  %v229 = vmax.f32 %v197, 1e-24
  %v230 = vmax.f32 %v200, 1e-24
  %v231 = vmax.f32 %v203, 1e-24
  %v232 = vmax.f32 %v206, 1e-24
  %v233 = vmax.f32 %v209, 1e-24
  %v234 = vmax.f32 %v212, 1e-24
  %v235 = vmax.f32 %v215, 1e-24
  %v236 = vmax.f32 %v218, 1e-24
  %v237 = vmax.f32 %v221, 1e-24
  %v238 = vrsqrt.pop %v222
  %v239 = vrsqrt.pop %v223
  %v240 = vrsqrt.pop %v224
  %v241 = vrsqrt.pop %v225
  %v242 = vrsqrt.pop %v226
  %v243 = vrsqrt.pop %v227
  %v244 = vrsqrt.pop %v228
  %v245 = vrsqrt.pop %v229
  %v246 = vrsqrt.pop %v230
  %v247 = vrsqrt.pop %v231
  %v248 = vrsqrt.pop %v232
  %v249 = vrsqrt.pop %v233
  %v250 = vrsqrt.pop %v234
  %v251 = vrsqrt.pop %v235
  %v252 = vrsqrt.pop %v236
  %v253 = vrsqrt.pop %v237
  %v254 = vmul.f32 %v29, %v238
  %v255 = vmul.f32 %v30, %v239
  %v256 = vmul.f32 %v31, %v240
  %v257 = vmul.f32 %v32, %v241
  %v258 = vmul.f32 %v33, %v242
  %v259 = vmul.f32 %v34, %v243
  %v260 = vmul.f32 %v35, %v244
  %v261 = vmul.f32 %v36, %v245
  %v262 = vmul.f32 %v37, %v246
  %v263 = vmul.f32 %v38, %v247
  %v264 = vmul.f32 %v39, %v248
  %v265 = vmul.f32 %v40, %v249
  %v266 = vmul.f32 %v41, %v250
  %v267 = vmul.f32 %v42, %v251
  %v268 = vmul.f32 %v43, %v252
  %v269 = vmul.f32 %v44, %v253
  %v270 = vpack.c.bf16 %v143, %v142
  %v271 = vpack.c.bf16 %v145, %v144
  %v272 = vpack.c.bf16 %v147, %v146
  %v273 = vpack.c.bf16 %v149, %v148
  %v274 = vpack.c.bf16 %v151, %v150
  %v275 = vpack.c.bf16 %v153, %v152
  %v276 = vpack.c.bf16 %v155, %v154
  %v277 = vpack.c.bf16 %v157, %v156
  %v286 = vunpack.c.l.b16 %v270
  %v287 = vunpack.c.h.b16 %v270
  %v288 = vunpack.c.l.b16 %v271
  %v289 = vunpack.c.h.b16 %v271
  %v290 = vunpack.c.l.b16 %v272
  %v291 = vunpack.c.h.b16 %v272
  %v292 = vunpack.c.l.b16 %v273
  %v293 = vunpack.c.h.b16 %v273
  %v294 = vunpack.c.l.b16 %v274
  %v295 = vunpack.c.h.b16 %v274
  %v296 = vunpack.c.l.b16 %v275
  %v297 = vunpack.c.h.b16 %v275
  %v298 = vunpack.c.l.b16 %v276
  %v299 = vunpack.c.h.b16 %v276
  %v300 = vunpack.c.l.b16 %v277
  %v301 = vunpack.c.h.b16 %v277
  %v302 = vpack.c.b16 %v286, %v286
  %v303 = vpack.c.b16 %v287, %v287
  %v304 = vpack.c.b16 %v288, %v288
  %v305 = vpack.c.b16 %v289, %v289
  %v306 = vpack.c.b16 %v290, %v290
  %v307 = vpack.c.b16 %v291, %v291
  %v308 = vpack.c.b16 %v292, %v292
  %v309 = vpack.c.b16 %v293, %v293
  %v310 = vpack.c.b16 %v294, %v294
  %v311 = vpack.c.b16 %v295, %v295
  %v312 = vpack.c.b16 %v296, %v296
  %v313 = vpack.c.b16 %v297, %v297
  %v314 = vpack.c.b16 %v298, %v298
  %v315 = vpack.c.b16 %v299, %v299
  %v316 = vpack.c.b16 %v300, %v300
  %v317 = vpack.c.b16 %v301, %v301
  %vm334 = vcmask 257024
  %335 = vst.msk [vmem:[%s2] sm:$0xf] %vm334, %v302
  %336 = vst.msk [vmem:[%s2 + $0x4] sm:$0xf] %vm334, %v303
  %337 = vst.msk [vmem:[%s2 + $0x8] sm:$0xf] %vm334, %v304
  %338 = vst.msk [vmem:[%s2 + $0xc] sm:$0xf] %vm334, %v305
  %339 = vst.msk [vmem:[%s2 + $0x10] sm:$0xf] %vm334, %v306
  %340 = vst.msk [vmem:[%s2 + $0x14] sm:$0xf] %vm334, %v307
  %341 = vst.msk [vmem:[%s2 + $0x18] sm:$0xf] %vm334, %v308
  %342 = vst.msk [vmem:[%s2 + $0x1c] sm:$0xf] %vm334, %v309
  %343 = vst.msk [vmem:[%s2 + $0x20] sm:$0xf] %vm334, %v310
  %344 = vst.msk [vmem:[%s2 + $0x24] sm:$0xf] %vm334, %v311
  %345 = vst.msk [vmem:[%s2 + $0x28] sm:$0xf] %vm334, %v312
  %346 = vst.msk [vmem:[%s2 + $0x2c] sm:$0xf] %vm334, %v313
  %347 = vst.msk [vmem:[%s2 + $0x30] sm:$0xf] %vm334, %v314
  %348 = vst.msk [vmem:[%s2 + $0x34] sm:$0xf] %vm334, %v315
  %349 = vst.msk [vmem:[%s2 + $0x38] sm:$0xf] %vm334, %v316
  %350 = vst.msk [vmem:[%s2 + $0x3c] sm:$0xf] %vm334, %v317
  %v351 = vpack.c.bf16 %v255, %v254
  %v352 = vpack.c.bf16 %v257, %v256
  %v353 = vpack.c.bf16 %v259, %v258
  %v354 = vpack.c.bf16 %v261, %v260
  %v355 = vpack.c.bf16 %v263, %v262
  %v356 = vpack.c.bf16 %v265, %v264
  %v357 = vpack.c.bf16 %v267, %v266
  %v358 = vpack.c.bf16 %v269, %v268
  %v367 = vunpack.c.l.b16 %v351
  %v368 = vunpack.c.h.b16 %v351
  %v369 = vunpack.c.l.b16 %v352
  %v370 = vunpack.c.h.b16 %v352
  %v371 = vunpack.c.l.b16 %v353
  %v372 = vunpack.c.h.b16 %v353
  %v373 = vunpack.c.l.b16 %v354
  %v374 = vunpack.c.h.b16 %v354
  %v375 = vunpack.c.l.b16 %v355
  %v376 = vunpack.c.h.b16 %v355
  %v377 = vunpack.c.l.b16 %v356
  %v378 = vunpack.c.h.b16 %v356
  %v379 = vunpack.c.l.b16 %v357
  %v380 = vunpack.c.h.b16 %v357
  %v381 = vunpack.c.l.b16 %v358
  %v382 = vunpack.c.h.b16 %v358
  %v383 = vpack.c.b16 %v367, %v367
  %v384 = vpack.c.b16 %v368, %v368
  %v385 = vpack.c.b16 %v369, %v369
  %v386 = vpack.c.b16 %v370, %v370
  %v387 = vpack.c.b16 %v371, %v371
  %v388 = vpack.c.b16 %v372, %v372
  %v389 = vpack.c.b16 %v373, %v373
  %v390 = vpack.c.b16 %v374, %v374
  %v391 = vpack.c.b16 %v375, %v375
  %v392 = vpack.c.b16 %v376, %v376
  %v393 = vpack.c.b16 %v377, %v377
  %v394 = vpack.c.b16 %v378, %v378
  %v395 = vpack.c.b16 %v379, %v379
  %v396 = vpack.c.b16 %v380, %v380
  %v397 = vpack.c.b16 %v381, %v381
  %v398 = vpack.c.b16 %v382, %v382
  %s415 = scalar_lea.vmem %s2, 64
  %416 = vst.msk [vmem:[%s415] sm:$0xf] %vm334, %v383
  %417 = vst.msk [vmem:[%s415 + $0x4] sm:$0xf] %vm334, %v384
  %418 = vst.msk [vmem:[%s415 + $0x8] sm:$0xf] %vm334, %v385
  %419 = vst.msk [vmem:[%s415 + $0xc] sm:$0xf] %vm334, %v386
  %420 = vst.msk [vmem:[%s415 + $0x10] sm:$0xf] %vm334, %v387
  %421 = vst.msk [vmem:[%s415 + $0x14] sm:$0xf] %vm334, %v388
  %422 = vst.msk [vmem:[%s415 + $0x18] sm:$0xf] %vm334, %v389
  %423 = vst.msk [vmem:[%s415 + $0x1c] sm:$0xf] %vm334, %v390
  %424 = vst.msk [vmem:[%s415 + $0x20] sm:$0xf] %vm334, %v391
  %425 = vst.msk [vmem:[%s415 + $0x24] sm:$0xf] %vm334, %v392
  %426 = vst.msk [vmem:[%s415 + $0x28] sm:$0xf] %vm334, %v393
  %427 = vst.msk [vmem:[%s415 + $0x2c] sm:$0xf] %vm334, %v394
  %428 = vst.msk [vmem:[%s415 + $0x30] sm:$0xf] %vm334, %v395
  %429 = vst.msk [vmem:[%s415 + $0x34] sm:$0xf] %vm334, %v396
  %430 = vst.msk [vmem:[%s415 + $0x38] sm:$0xf] %vm334, %v397
  %431 = vst.msk [vmem:[%s415 + $0x3c] sm:$0xf] %vm334, %v398
  %v432 = vmul.f32 %v142, %v254
  %v433 = vmul.f32 %v143, %v255
  %v434 = vmul.f32 %v144, %v256
  %v435 = vmul.f32 %v145, %v257
  %v436 = vmul.f32 %v146, %v258
  %v437 = vmul.f32 %v147, %v259
  %v438 = vmul.f32 %v148, %v260
  %v439 = vmul.f32 %v149, %v261
  %v440 = vmul.f32 %v150, %v262
  %v441 = vmul.f32 %v151, %v263
  %v442 = vmul.f32 %v152, %v264
  %v443 = vmul.f32 %v153, %v265
  %v444 = vmul.f32 %v154, %v266
  %v445 = vmul.f32 %v155, %v267
  %v446 = vmul.f32 %v156, %v268
  %v447 = vmul.f32 %v157, %v269
  %v448 = vsel %vm61, %v432, 0.0
  %449 = vadd.xlane.f32.xlu0 %v448
  %v450 = vpop.xlane.xlu0 %449
  %v451 = vsel %vm61, %v433, 0.0
  %452 = vadd.xlane.f32.xlu0 %v451
  %v453 = vpop.xlane.xlu0 %452
  %v454 = vsel %vm61, %v434, 0.0
  %455 = vadd.xlane.f32.xlu0 %v454
  %v456 = vpop.xlane.xlu0 %455
  %v457 = vsel %vm61, %v435, 0.0
  %458 = vadd.xlane.f32.xlu0 %v457
  %v459 = vpop.xlane.xlu0 %458
  %v460 = vsel %vm61, %v436, 0.0
  %461 = vadd.xlane.f32.xlu0 %v460
  %v462 = vpop.xlane.xlu0 %461
  %v463 = vsel %vm61, %v437, 0.0
  %464 = vadd.xlane.f32.xlu0 %v463
  %v465 = vpop.xlane.xlu0 %464
  %v466 = vsel %vm61, %v438, 0.0
  %467 = vadd.xlane.f32.xlu0 %v466
  %v468 = vpop.xlane.xlu0 %467
  %v469 = vsel %vm61, %v439, 0.0
  %470 = vadd.xlane.f32.xlu0 %v469
  %v471 = vpop.xlane.xlu0 %470
  %v472 = vsel %vm61, %v440, 0.0
  %473 = vadd.xlane.f32.xlu0 %v472
  %v474 = vpop.xlane.xlu0 %473
  %v475 = vsel %vm61, %v441, 0.0
  %476 = vadd.xlane.f32.xlu0 %v475
  %v477 = vpop.xlane.xlu0 %476
  %v478 = vsel %vm61, %v442, 0.0
  %479 = vadd.xlane.f32.xlu0 %v478
  %v480 = vpop.xlane.xlu0 %479
  %v481 = vsel %vm61, %v443, 0.0
  %482 = vadd.xlane.f32.xlu0 %v481
  %v483 = vpop.xlane.xlu0 %482
  %v484 = vsel %vm61, %v444, 0.0
  %485 = vadd.xlane.f32.xlu0 %v484
  %v486 = vpop.xlane.xlu0 %485
  %v487 = vsel %vm61, %v445, 0.0
  %488 = vadd.xlane.f32.xlu0 %v487
  %v489 = vpop.xlane.xlu0 %488
  %v490 = vsel %vm61, %v446, 0.0
  %491 = vadd.xlane.f32.xlu0 %v490
  %v492 = vpop.xlane.xlu0 %491
  %v493 = vsel %vm61, %v447, 0.0
  %494 = vadd.xlane.f32.xlu0 %v493
  %v495 = vpop.xlane.xlu0 %494
  %v496 = vmul.f32 %v450, 10.0
  %v497 = vmul.f32 %v453, 10.0
  %v498 = vmul.f32 %v456, 10.0
  %v499 = vmul.f32 %v459, 10.0
  %v500 = vmul.f32 %v462, 10.0
  %v501 = vmul.f32 %v465, 10.0
  %v502 = vmul.f32 %v468, 10.0
  %v503 = vmul.f32 %v471, 10.0
  %v504 = vmul.f32 %v474, 10.0
  %v505 = vmul.f32 %v477, 10.0
  %v506 = vmul.f32 %v480, 10.0
  %v507 = vmul.f32 %v483, 10.0
  %v508 = vmul.f32 %v486, 10.0
  %v509 = vmul.f32 %v489, 10.0
  %v510 = vmul.f32 %v492, 10.0
  %v511 = vmul.f32 %v495, 10.0
  %vm512 = vcmask 7168
  %513 = vst.msk [vmem:[%s3] sm:$0xff] %vm512, %v496
  %514 = vst.msk [vmem:[%s3 + $0x8] sm:$0xff] %vm512, %v497
  %515 = vst.msk [vmem:[%s3 + $0x10] sm:$0xff] %vm512, %v498
  %516 = vst.msk [vmem:[%s3 + $0x18] sm:$0xff] %vm512, %v499
  %517 = vst.msk [vmem:[%s3 + $0x20] sm:$0xff] %vm512, %v500
  %518 = vst.msk [vmem:[%s3 + $0x28] sm:$0xff] %vm512, %v501
  %519 = vst.msk [vmem:[%s3 + $0x30] sm:$0xff] %vm512, %v502
  %520 = vst.msk [vmem:[%s3 + $0x38] sm:$0xff] %vm512, %v503
  %521 = vst.msk [vmem:[%s3 + $0x40] sm:$0xff] %vm512, %v504
  %522 = vst.msk [vmem:[%s3 + $0x48] sm:$0xff] %vm512, %v505
  %523 = vst.msk [vmem:[%s3 + $0x50] sm:$0xff] %vm512, %v506
  %524 = vst.msk [vmem:[%s3 + $0x58] sm:$0xff] %vm512, %v507
  %525 = vst.msk [vmem:[%s3 + $0x60] sm:$0xff] %vm512, %v508
  %526 = vst.msk [vmem:[%s3 + $0x68] sm:$0xff] %vm512, %v509
  %527 = vst.msk [vmem:[%s3 + $0x70] sm:$0xff] %vm512, %v510
  %528 = vst.msk [vmem:[%s3 + $0x78] sm:$0xff] %vm512, %v511
  // Predicated region
  $region10: #{tpu_custom_call.1} parent=0 // pred_check
    _
  $region11: #{tpu_custom_call.1} parent=0 // pred_check_branch
    %530 = sbr.rel (0) target = $region13
  $region12: #{tpu_custom_call.1} parent=0 // pred_region
    _
  $region13: #{tpu_custom_call.1} parent=0 // pred_fallthru
    _
  // Predicated region
  $region14: #{tpu_custom_call.1} parent=0 // pred_check
    _
  $region15: #{tpu_custom_call.1} parent=0 // pred_check_branch
    %532 = sbr.rel (0) target = $region17
  $region16: #{tpu_custom_call.1} parent=0 // pred_region
    _
  $region17: #{tpu_custom_call.1} parent=0 // pred_fallthru
    _
  // Predicated region
  $region18: #{tpu_custom_call.1} parent=0 // pred_check
    _
  $region19: #{tpu_custom_call.1} parent=0 // pred_check_branch
    %534 = sbr.rel (0) target = $region21
  $region20: #{tpu_custom_call.1} parent=0 // pred_region
    _
  $region21: #{tpu_custom_call.1} parent=0 // pred_fallthru
    _
  // Predicated region
  $region22: #{tpu_custom_call.1} parent=0 // pred_check
    _
  $region23: #{tpu_custom_call.1} parent=0 // pred_check_branch
    %536 = sbr.rel (0) target = $region25
  $region24: #{tpu_custom_call.1} parent=0 // pred_region
    _
  $region25: #{tpu_custom_call.1} parent=0 // pred_fallthru
    _

</llo_original>
